<compile_context>
chip_gen: v7x
topology: tpu7x:2x2x1
jax: 0.10.0
libtpu: 0.0.40
codegen_flags: <defaults>
</compile_context>

<pallas_src>
import functools

import jax
import jax.numpy as jnp
from jax.experimental import pallas as pl
from jax.experimental.pallas import tpu as pltpu

NUM_CLASSES = 20                    # fixed by repeat_interleave(repeats=20)
_LOG2E = 1.4426950408889634         # log2(e)


def _round_up(v, m):
    return -(-v // m) * m


def _ent_kernel(x_ref, o_ref):
    # x_ref: (C, tile) block with classes on sublanes; o_ref: (1, tile) f32 row.
    x = x_ref[...].astype(jnp.float32)                # (C, tile) dense vregs
    m = jnp.max(x, axis=0, keepdims=True)             # (1, tile) sublane reduce
    xm = x - m
    e = jnp.exp(xm)                                   # only full-width transcendental
    s = jnp.sum(e, axis=0, keepdims=True)             # S = sum_c e        (1, tile)
    w = jnp.sum(e * xm, axis=0, keepdims=True)        # W = sum_c e*(x-m)  (1, tile)
    # H_bits = log2(S) - log2(e) * W / S.  S >= 1 always, so never NaN/inf.
    ent = jnp.log2(s) - (_LOG2E * w) * pl.reciprocal(s, approx=False)
    o_ref[...] = ent.astype(o_ref.dtype)


@functools.lru_cache(maxsize=None)
def _build_call(n_blocks, tile, n_classes):
    n_pad = n_blocks * tile
    return pl.pallas_call(
        _ent_kernel,
        out_shape=jax.ShapeDtypeStruct((1, n_pad), jnp.float32),
        grid_spec=pltpu.PrefetchScalarGridSpec(
            num_scalar_prefetch=0,
            grid=(n_blocks,),
            in_specs=[pl.BlockSpec((n_classes, tile), lambda i: (0, i))],
            out_specs=pl.BlockSpec((1, tile), lambda i: (0, i)),
        ),
        compiler_params=pltpu.CompilerParams(
            dimension_semantics=("parallel",),          # shards row blocks on v7x
            vmem_limit_bytes=32 * 1024 * 1024,          # plenty for 32K-64K row tiles
        ),
    )


def my_ent_loss(x, *, tile_n=32768):
    """Per-sample softmax entropy in bits.  x: (N, 20) float -> (N,) float32.

    tile_n: target rows per grid step (sweep 16384/32768/65536; with the
    (20, tile) layout a 32768-row block is ~3 MiB f32 / ~1.5 MiB bf16 in VMEM,
    so even 64K rows fits the 32 MiB scoped limit on every generation).
    Works for any N and any float dtype; compute is f32, output is f32.
    """
    n, c = x.shape
    if c != NUM_CLASSES:
        raise ValueError(f"MyEntLoss expects {NUM_CLASSES} classes, got {c}")
    tile_n = max(128, int(tile_n))

    # Balance rows over ceil(N / tile_n) blocks; force an even block count >= 2
    # (v7x megacore balance) and round the per-block rows to 512 (quantises the
    # compile-cache key; the few extra zero-padded rows are sliced off below).
    n_blocks = -(-n // tile_n)
    n_blocks = max(2, n_blocks + (n_blocks % 2))
    tile = _round_up(-(-n // n_blocks), 512)
    n_pad = n_blocks * tile

    # Tail-pad + transpose to (C, n_pad) in one fused XLA copy: the kernel then
    # reads dense (20, tile) blocks with the class axis on sublanes.
    xt = jnp.pad(x, ((0, n_pad - n), (0, 0))).T

    out = _build_call(n_blocks, tile, c)(xt)            # (1, n_pad) f32
    return out.reshape(n_pad)[:n]


def _reference(x):
    # Pure-JAX reference mirroring the PyTorch module exactly.
    s = jax.nn.softmax(x.astype(jnp.float32), axis=1)
    p = s / jnp.sum(s, axis=1, keepdims=True)
    return jnp.sum(-(p * jnp.log2(p)), axis=1)


if __name__ == "__main__":
    key = jax.random.PRNGKey(0)
    k1, k2 = jax.random.split(key)

    # Small shapes consistent with the module: (N, cls_out_channels=20) logits.
    x1 = 4.0 * jax.random.normal(k1, (64, NUM_CLASSES), dtype=jnp.float32)
    out1 = jax.block_until_ready(my_ent_loss(x1))
    ref1 = _reference(x1)
    assert out1.shape == (64,)
    assert out1.dtype == jnp.float32
    assert jnp.allclose(out1, ref1, atol=2e-5, rtol=2e-5), \
        float(jnp.max(jnp.abs(out1 - ref1)))

    # Exercise the padding + multi-block (grid > 1) path with a ragged N.
    x2 = 4.0 * jax.random.normal(k2, (333, NUM_CLASSES), dtype=jnp.float32)
    out2 = jax.block_until_ready(my_ent_loss(x2))
    ref2 = _reference(x2)
    assert out2.shape == (333,)
    assert jnp.allclose(out2, ref2, atol=2e-5, rtol=2e-5), \
        float(jnp.max(jnp.abs(out2 - ref2)))

    print("KERNEL_OK")
</pallas_src>

<mosaic_0001>
module attributes {stable_mosaic.version = 11 : i64} {
  func.func @_ent_kernel(%arg0: i32, %arg1: memref<20x512xf32, #tpu.memory_space<vmem>>, %arg2: memref<1x512xf32, #tpu.memory_space<vmem>>) attributes {dimension_semantics = [#tpu.dimension_semantics<parallel>], iteration_bounds = array<i64: 2>, scalar_prefetch = 0 : i64, scratch_operands = 0 : i64, tpu.core_type = #tpu.core_type<tc>, window_params = [{transform_indices = @transform_0, window_bounds = array<i64: 20, 512>}, {transform_indices = @transform_1, window_bounds = array<i64: 1, 512>}]} {
    %c0 = arith.constant 0 : index
    %c0_0 = arith.constant 0 : index
    %0 = vector.load %arg1[%c0, %c0_0] : memref<20x512xf32, #tpu.memory_space<vmem>>, vector<20x512xf32>
    %cst = arith.constant dense<0xFF800000> : vector<512xf32>
    %1 = vector.multi_reduction <maximumf>, %0, %cst [0] : vector<20x512xf32> to vector<512xf32>
    %2 = vector.shape_cast %1 : vector<512xf32> to vector<1x512xf32>
    %3 = vector.broadcast %2 : vector<1x512xf32> to vector<20x512xf32>
    %4 = arith.subf %0, %3 : vector<20x512xf32>
    %5 = math.exp %4 : vector<20x512xf32>
    %cst_1 = arith.constant dense<0.000000e+00> : vector<512xf32>
    %6 = vector.multi_reduction <add>, %5, %cst_1 [0] : vector<20x512xf32> to vector<512xf32>
    %7 = vector.shape_cast %6 : vector<512xf32> to vector<1x512xf32>
    %8 = arith.mulf %5, %4 : vector<20x512xf32>
    %cst_2 = arith.constant dense<0.000000e+00> : vector<512xf32>
    %9 = vector.multi_reduction <add>, %8, %cst_2 [0] : vector<20x512xf32> to vector<512xf32>
    %10 = vector.shape_cast %9 : vector<512xf32> to vector<1x512xf32>
    %11 = math.log %7 : vector<1x512xf32>
    %cst_3 = arith.constant 2.000000e+00 : f32
    %12 = math.log %cst_3 : f32
    %13 = vector.broadcast %12 : f32 to vector<1x512xf32>
    %14 = arith.divf %11, %13 : vector<1x512xf32>
    %cst_4 = arith.constant 1.44269502 : f32
    %15 = vector.broadcast %cst_4 : f32 to vector<1x512xf32>
    %16 = arith.mulf %15, %10 : vector<1x512xf32>
    %17 = tpu.reciprocal %7 : vector<1x512xf32> -> vector<1x512xf32>
    %18 = arith.mulf %16, %17 : vector<1x512xf32>
    %19 = arith.subf %14, %18 : vector<1x512xf32>
    %c0_5 = arith.constant 0 : index
    %c0_6 = arith.constant 0 : index
    %20 = vector.load %arg2[%c0_5, %c0_6] : memref<1x512xf32, #tpu.memory_space<vmem>>, vector<1x512xf32>
    tpu.vector_store %arg2[%c0_5, %c0_6], %19 {strides = array<i32>} : memref<1x512xf32, #tpu.memory_space<vmem>>, vector<1x512xf32>,
    return
  }
  func.func @transform_0(%arg0: i32) -> (i32, i32) {
    %c0_i32 = arith.constant 0 : i32
    %c0_i32_0 = arith.constant 0 : i32
    return %c0_i32, %arg0 : i32, i32
  }
  func.func @transform_1(%arg0: i32) -> (i32, i32) {
    %c0_i32 = arith.constant 0 : i32
    %c0_i32_0 = arith.constant 0 : i32
    return %c0_i32, %arg0 : i32, i32
  }
}

</mosaic_0001>

<llo_original>
// kernel: tpu_custom_call.1
$region0: #{tpu_custom_call.1}
  #allocation0 [shape = 'u32[]', space=smem, size = 0x4, offset = 0x4, fixed_abs, tag = 'smem constant byte address 0x4 - core index']
  #allocation1 [shape = 'u32[144,128]{1,0:T(1,128)}', space=vmem, size = 0x12000, scoped, tag = 'internal scratch']
  %s0 = inlined_call_operand.hbm [shape: f32[20,1024], index: 0, kind: input, shape index: {}]
  %s1 = inlined_call_operand.hbm [shape: f32[1,1024], index: 1, kind: output, shape index: {}]
  %s2 = sld [smem:[#allocation0]]
  $region41: #{tpu_custom_call.1} parent=0
    _
  %s4 = ssub.s32 1, %s2
  %s5 = scalar_select 0, %s4, %s2
  $region1: #{tpu_custom_call.1} parent=0
    #allocation2 [shape = 'u8[98304]{0}', space=vmem, size = 0x18000, scoped, tag = 'input window, operand 0']
    #allocation3 [shape = 's32[2]{0}', space=sflag, size = 0x8, scoped, tag = 'scoped memory for tpu_custom_call.1']
    #allocation4 [shape = 's32[2]{0}', space=sflag, size = 0x8, scoped, tag = 'scoped memory for tpu_custom_call.1']
    #allocation5 [shape = 'u8[4096]{0}', space=vmem, size = 0x1000, scoped, tag = 'output window, operand 0']
    %6 = vsyncpa [#allocation3], 0
    %s7 = scalar_lea.sflag [#allocation3], 1
    %8 = vsyncpa %s7, 0
    %9 = vsyncpa [#allocation4], 0
    %s10 = scalar_lea.sflag [#allocation4], 1
    %11 = vsyncpa %s10, 0
    loop: start=0, step=1, limit=4
    $region2: #{tpu_custom_call.1} parent=1 // loop_pre_header
      _
    $region3: #{tpu_custom_call.1} parent=1 // loop_header
      %s13 = sphi 0, %s17
      %p14 = scmp.ge.s32.totalorder %s13, 4
      %s23 = sphi 0, %s25
      %s26 = sphi 0, %s23
      %s27 = sphi 0, %s26
      %s43 = sphi 0, %s27
      %s49 = sphi 0, %s51
      %s52 = sphi 0, %s49
      %s53 = sphi 0, %s52
      %s69 = sphi 0, %s53
    $region4: #{tpu_custom_call.1} parent=1 // loop_header_branch
      %16 = sbr.rel (%p14) target = $region8
    $region5: #{tpu_custom_call.1} parent=1 // loop_body
      %s18 = ssub.s32 %s13, 1
      %s19 = ssub.s32 %s13, 2
      %s20 = sadd.s32 %s13, 1
      %s21 = ssub.s32 %s13, %s20
      %p22 = scmp.eq.s32.totalorder %s21, 0
      %s24 = sadd.s32 %s23, 1
      %s25 = scalar_select %p22, %s23, %s24
      %p28 = pneg %p22
      %p29 = scmp.eq.s32.totalorder %s13, 1
      %p30 = por %p28, %p29
      %p31 = scmp.ne.s32.totalorder %s23, %s26
      %p32 = scmp.eq.s32.totalorder %s13, 0
      %p33 = por %p31, %p32
      %p34 = scmp.ne.s32.totalorder %s23, %s26
      %p35 = scmp.eq.s32.totalorder %s18, 1
      %p36 = por %p34, %p35
      %p37 = scmp.ne.s32.totalorder %s26, %s27
      %p38 = scmp.eq.s32.totalorder %s18, 0
      %p39 = por %p37, %p38
      %p40 = scmp.ne.s32.totalorder %s26, %s27
      %p41 = scmp.eq.s32.totalorder %s19, 1
      %p42 = por %p40, %p41
      %p44 = scmp.ne.s32.totalorder %s27, %s43
      %p45 = scmp.eq.s32.totalorder %s19, 0
      %p46 = por %p44, %p45
      %s47 = ssub.s32 %s13, %s20
      %p48 = scmp.eq.s32.totalorder %s47, 0
      %s50 = sadd.s32 %s49, 1
      %s51 = scalar_select %p48, %s49, %s50
      %p54 = pneg %p48
      %p55 = scmp.eq.s32.totalorder %s13, 1
      %p56 = por %p54, %p55
      %p57 = scmp.ne.s32.totalorder %s49, %s52
      %p58 = scmp.eq.s32.totalorder %s13, 0
      %p59 = por %p57, %p58
      %p60 = scmp.ne.s32.totalorder %s49, %s52
      %p61 = scmp.eq.s32.totalorder %s18, 1
      %p62 = por %p60, %p61
      %p63 = scmp.ne.s32.totalorder %s52, %s53
      %p64 = scmp.eq.s32.totalorder %s18, 0
      %p65 = por %p63, %p64
      %p66 = scmp.ne.s32.totalorder %s52, %s53
      %p67 = scmp.eq.s32.totalorder %s19, 1
      %p68 = por %p66, %p67
      %p70 = scmp.ne.s32.totalorder %s53, %s69
      %p71 = scmp.eq.s32.totalorder %s19, 0
      %p72 = por %p70, %p71
      %p73 = scmp.le.s32.totalorder 1, %s13
      %p74 = scmp.lt.s32.totalorder %s13, 3
      %p75 = pnand %p73, %p74
      %p76 = pneg %p75
      // Predicated region
      $region9: #{tpu_custom_call.1} parent=5 // pred_check
        _
      $region10: #{tpu_custom_call.1} parent=5 // pred_check_branch
        %78 = sbr.rel (%p75) target = $region12
      $region11: #{tpu_custom_call.1} parent=5 // pred_region
        %s79 = ssub.s32 %s13, 1
      $region12: #{tpu_custom_call.1} parent=5 // pred_fallthru
        _
      %p80 = scmp.lt.s32.totalorder %s13, 2
      // Predicated region
      $region13: #{tpu_custom_call.1} parent=5 // pred_check
        %p81 = pneg %p80
      $region14: #{tpu_custom_call.1} parent=5 // pred_check_branch
        %83 = sbr.rel (%p81) target = $region16
      $region15: #{tpu_custom_call.1} parent=5 // pred_region
        // Predicated region
        $region17: #{tpu_custom_call.1} parent=15 // pred_check
          %p84 = pneg %p33
        $region18: #{tpu_custom_call.1} parent=15 // pred_check_branch
          %86 = sbr.rel (%p84) target = $region20
        $region19: #{tpu_custom_call.1} parent=15 // pred_region
          %s87 = sand.u32 %s23, 1
          %s88 = scalar_lea.sflag [#allocation3], %s87
          %s89 = sand.u32 %s23, 1
          %s90 = smul.addr %s89, 96
          %s91 = scalar_lea.vmem [#allocation2], %s90
          %s92 = smul.u32 4, %s13
          %s94 = ssub.s32 1536, 1536
          %95 = vsyncadd %s88, %s94
          %s96 = smul.addr %s92, 128
          %s97 = scalar_lea.hbm %s0, %s96
          %s98 = sshll.u32 %s91, 4
          %s99 = int_to_ptr.vmem [resolvable:$true] %s98
          %104 = dma.hbm_to_vmem [thread:$0]  %s97, 1536, %s99, %s88, 1024, 512, 32
        $region20: #{tpu_custom_call.1} parent=15 // pred_fallthru
          _
      $region16: #{tpu_custom_call.1} parent=5 // pred_fallthru
        _
      %p105 = scmp.le.s32.totalorder 1, %s13
      %p106 = scmp.lt.s32.totalorder %s13, 3
      %p107 = pnand %p105, %p106
      %p108 = pneg %p107
      // Predicated region
      $region21: #{tpu_custom_call.1} parent=5 // pred_check
        _
      $region22: #{tpu_custom_call.1} parent=5 // pred_check_branch
        %110 = sbr.rel (%p107) target = $region24
      $region23: #{tpu_custom_call.1} parent=5 // pred_region
        %s111 = ssub.s32 %s13, 1
        %s112 = sand.u32 %s26, 1
        %s113 = scalar_lea.sflag [#allocation3], %s112
        %s114 = sand.u32 %s26, 1
        %s115 = smul.addr %s114, 96
        %s116 = scalar_lea.vmem [#allocation2], %s115
        // Predicated region
        $region25: #{tpu_custom_call.1} parent=23 // pred_check
          %p117 = pneg %p39
        $region26: #{tpu_custom_call.1} parent=23 // pred_check_branch
          %119 = sbr.rel (%p117) target = $region28
        $region27: #{tpu_custom_call.1} parent=23 // pred_region
          %120 = dma.done %s113, 1536
        $region28: #{tpu_custom_call.1} parent=23 // pred_fallthru
          _
        %s121 = sand.u32 %s26, 1
        %s122 = scalar_lea.sflag [#allocation3], %s121
        %s123 = sand.u32 %s26, 1
        %s124 = smul.addr %s123, 96
        %s125 = scalar_lea.vmem [#allocation2], %s124
        %p126 = pneg %p39
        %p127 = pneg %p36
        %p128 = pneg %p65
        %p129 = pneg %p62
        %s130 = sand.u32 %s52, 1
        %s131 = scalar_lea.sflag [#allocation4], %s130
        %s132 = sand.u32 %s52, 1
        %s133 = smul.addr %s132, 4
        %s134 = scalar_lea.vmem [#allocation5], %s133
        %s135 = smul.u32 4, %s18
        %s136 = smul.u32 4, %s18
        %v137 = vld [vmem:[%s116] sm:$0xff]
        %v138 = vld [vmem:[%s116 + $0x8] sm:$0xff]
        %v139 = vld [vmem:[%s116 + $0x10] sm:$0xff]
        %v140 = vld [vmem:[%s116 + $0x18] sm:$0xff]
        %v141 = vld [vmem:[%s116 + $0x20] sm:$0xff]
        %v142 = vld [vmem:[%s116 + $0x28] sm:$0xff]
        %v143 = vld [vmem:[%s116 + $0x30] sm:$0xff]
        %v144 = vld [vmem:[%s116 + $0x38] sm:$0xff]
        %v145 = vld [vmem:[%s116 + $0x40] sm:$0xf]
        %v146 = vld [vmem:[%s116 + $0x48] sm:$0xf]
        %v147 = vld [vmem:[%s116 + $0x50] sm:$0xf]
        %v148 = vld [vmem:[%s116 + $0x58] sm:$0xf]
        %v149 = vmax.f32 %v137, %v141
        %vm150 = vcmask 1043456
        %v151 = vsel %vm150, %v145, -inf
        %v152 = vmax.f32 %v149, %v151
        %v153 = vrot.slane %v152, 4
        %v154 = vmax.f32 %v152, %v153
        %v155 = vrot.slane %v154, 2
        %v156 = vmax.f32 %v154, %v155
        %v157 = vrot.slane %v156, 1
        %v158 = vmax.f32 %v156, %v157
        %v159 = vmax.f32 %v138, %v142
        %v160 = vsel %vm150, %v146, -inf
        %v161 = vmax.f32 %v159, %v160
        %v162 = vrot.slane %v161, 4
        %v163 = vmax.f32 %v161, %v162
        %v164 = vrot.slane %v163, 2
        %v165 = vmax.f32 %v163, %v164
        %v166 = vrot.slane %v165, 1
        %v167 = vmax.f32 %v165, %v166
        %v168 = vmax.f32 %v139, %v143
        %v169 = vsel %vm150, %v147, -inf
        %v170 = vmax.f32 %v168, %v169
        %v171 = vrot.slane %v170, 4
        %v172 = vmax.f32 %v170, %v171
        %v173 = vrot.slane %v172, 2
        %v174 = vmax.f32 %v172, %v173
        %v175 = vrot.slane %v174, 1
        %v176 = vmax.f32 %v174, %v175
        %v177 = vmax.f32 %v140, %v144
        %v178 = vsel %vm150, %v148, -inf
        %v179 = vmax.f32 %v177, %v178
        %v180 = vrot.slane %v179, 4
        %v181 = vmax.f32 %v179, %v180
        %v182 = vrot.slane %v181, 2
        %v183 = vmax.f32 %v181, %v182
        %v184 = vrot.slane %v183, 1
        %v185 = vmax.f32 %v183, %v184
        %v186 = vsub.f32 %v137, %v158
        %v187 = vsub.f32 %v138, %v167
        %v188 = vsub.f32 %v139, %v176
        %v189 = vsub.f32 %v140, %v185
        %v190 = vsub.f32 %v141, %v158
        %v191 = vsub.f32 %v142, %v167
        %v192 = vsub.f32 %v143, %v176
        %v193 = vsub.f32 %v144, %v185
        %v194 = vsub.f32 %v145, %v158
        %v195 = vsub.f32 %v146, %v167
        %v196 = vsub.f32 %v147, %v176
        %v197 = vsub.f32 %v148, %v185
        %v198 = vmul.f32 %v186, 1.442695
        %v199 = vpow.pop %v198
        %v200 = vmul.f32 %v187, 1.442695
        %v201 = vpow.pop %v200
        %v202 = vmul.f32 %v188, 1.442695
        %v203 = vpow.pop %v202
        %v204 = vmul.f32 %v189, 1.442695
        %v205 = vpow.pop %v204
        %v206 = vmul.f32 %v190, 1.442695
        %v207 = vpow.pop %v206
        %v208 = vmul.f32 %v191, 1.442695
        %v209 = vpow.pop %v208
        %v210 = vmul.f32 %v192, 1.442695
        %v211 = vpow.pop %v210
        %v212 = vmul.f32 %v193, 1.442695
        %v213 = vpow.pop %v212
        %v214 = vmul.f32 %v194, 1.442695
        %v215 = vpow.pop %v214
        %v216 = vmul.f32 %v195, 1.442695
        %v217 = vpow.pop %v216
        %v218 = vmul.f32 %v196, 1.442695
        %v219 = vpow.pop %v218
        %v220 = vmul.f32 %v197, 1.442695
        %v221 = vpow.pop %v220
        %v222 = vadd.f32 %v199, %v207
        %v223 = vsel %vm150, %v215, 0.0
        %v224 = vadd.f32 %v222, %v223
        %v225 = vrot.slane %v224, 4
        %v226 = vadd.f32 %v224, %v225
        %v227 = vrot.slane %v226, 2
        %v228 = vadd.f32 %v226, %v227
        %v229 = vrot.slane %v228, 1
        %v230 = vadd.f32 %v228, %v229
        %v231 = vadd.f32 %v201, %v209
        %v232 = vsel %vm150, %v217, 0.0
        %v233 = vadd.f32 %v231, %v232
        %v234 = vrot.slane %v233, 4
        %v235 = vadd.f32 %v233, %v234
        %v236 = vrot.slane %v235, 2
        %v237 = vadd.f32 %v235, %v236
        %v238 = vrot.slane %v237, 1
        %v239 = vadd.f32 %v237, %v238
        %v240 = vadd.f32 %v203, %v211
        %v241 = vsel %vm150, %v219, 0.0
        %v242 = vadd.f32 %v240, %v241
        %v243 = vrot.slane %v242, 4
        %v244 = vadd.f32 %v242, %v243
        %v245 = vrot.slane %v244, 2
        %v246 = vadd.f32 %v244, %v245
        %v247 = vrot.slane %v246, 1
        %v248 = vadd.f32 %v246, %v247
        %v249 = vadd.f32 %v205, %v213
        %v250 = vsel %vm150, %v221, 0.0
        %v251 = vadd.f32 %v249, %v250
        %v252 = vrot.slane %v251, 4
        %v253 = vadd.f32 %v251, %v252
        %v254 = vrot.slane %v253, 2
        %v255 = vadd.f32 %v253, %v254
        %v256 = vrot.slane %v255, 1
        %v257 = vadd.f32 %v255, %v256
        %v258 = vmul.f32 %v199, %v186
        %v259 = vmul.f32 %v201, %v187
        %v260 = vmul.f32 %v203, %v188
        %v261 = vmul.f32 %v205, %v189
        %v262 = vmul.f32 %v207, %v190
        %v263 = vmul.f32 %v209, %v191
        %v264 = vmul.f32 %v211, %v192
        %v265 = vmul.f32 %v213, %v193
        %v266 = vmul.f32 %v215, %v194
        %v267 = vmul.f32 %v217, %v195
        %v268 = vmul.f32 %v219, %v196
        %v269 = vmul.f32 %v221, %v197
        %v270 = vadd.f32 %v258, %v262
        %v271 = vsel %vm150, %v266, 0.0
        %v272 = vadd.f32 %v270, %v271
        %v273 = vrot.slane %v272, 4
        %v274 = vadd.f32 %v272, %v273
        %v275 = vrot.slane %v274, 2
        %v276 = vadd.f32 %v274, %v275
        %v277 = vrot.slane %v276, 1
        %v278 = vadd.f32 %v276, %v277
        %v279 = vadd.f32 %v259, %v263
        %v280 = vsel %vm150, %v267, 0.0
        %v281 = vadd.f32 %v279, %v280
        %v282 = vrot.slane %v281, 4
        %v283 = vadd.f32 %v281, %v282
        %v284 = vrot.slane %v283, 2
        %v285 = vadd.f32 %v283, %v284
        %v286 = vrot.slane %v285, 1
        %v287 = vadd.f32 %v285, %v286
        %v288 = vadd.f32 %v260, %v264
        %v289 = vsel %vm150, %v268, 0.0
        %v290 = vadd.f32 %v288, %v289
        %v291 = vrot.slane %v290, 4
        %v292 = vadd.f32 %v290, %v291
        %v293 = vrot.slane %v292, 2
        %v294 = vadd.f32 %v292, %v293
        %v295 = vrot.slane %v294, 1
        %v296 = vadd.f32 %v294, %v295
        %v297 = vadd.f32 %v261, %v265
        %v298 = vsel %vm150, %v269, 0.0
        %v299 = vadd.f32 %v297, %v298
        %v300 = vrot.slane %v299, 4
        %v301 = vadd.f32 %v299, %v300
        %v302 = vrot.slane %v301, 2
        %v303 = vadd.f32 %v301, %v302
        %v304 = vrot.slane %v303, 1
        %v305 = vadd.f32 %v303, %v304
        %v306 = vlog2.pop %v230
        %v307 = vmul.f32 %v306, 0.6931472
        %v308 = vlog2.pop %v239
        %v309 = vmul.f32 %v308, 0.6931472
        %v310 = vlog2.pop %v248
        %v311 = vmul.f32 %v310, 0.6931472
        %v312 = vlog2.pop %v257
        %v313 = vmul.f32 %v312, 0.6931472
        %v314 = vrcp.pop 0.6931472
        %v315 = vmul.f32 %v307, %v314
        %v316 = vmul.f32 %v309, %v314
        %v317 = vmul.f32 %v311, %v314
        %v318 = vmul.f32 %v313, %v314
        %v319 = vmul.f32 %v278, 1.442695
        %v320 = vmul.f32 %v287, 1.442695
        %v321 = vmul.f32 %v296, 1.442695
        %v322 = vmul.f32 %v305, 1.442695
        %v323 = vrcp.pop %v230
        %v324 = vrcp.pop %v239
        %v325 = vrcp.pop %v248
        %v326 = vrcp.pop %v257
        %v327 = vmul.f32 %v319, %v323
        %v328 = vmul.f32 %v320, %v324
        %v329 = vmul.f32 %v321, %v325
        %v330 = vmul.f32 %v322, %v326
        %v331 = vsub.f32 %v315, %v327
        %v332 = vsub.f32 %v316, %v328
        %v333 = vsub.f32 %v317, %v329
        %v334 = vsub.f32 %v318, %v330
        %v339 = vcombine.low %v331, %v332
        %v340 = vcombine.low %v333, %v334
        %v342 = vunpack.c.l.s4 1966171168
        %v343 = vunpack.c.0.s8 %v342
        %v344 = vlaneseq
        %v345 = vshrl.u32 %v344, 7
        %v346 = vsub.s32 %v343, %v345
        %v347 = vrot.slane %v339, %v346
        %v349 = vunpack.c.l.s4 1966171168
        %v350 = vunpack.c.0.s8 %v349
        %v351 = vlaneseq
        %v352 = vshrl.u32 %v351, 7
        %v353 = vsub.s32 %v350, %v352
        %v354 = vrot.slane %v340, %v353
        %v355 = vcombine.low %v347, %v354
        %v357 = vunpack.c.l.s4 1966171168
        %v358 = vunpack.c.0.s8 %v357
        %v359 = vlaneseq
        %v360 = vshrl.u32 %v359, 7
        %v361 = vsub.s32 %v358, %v360
        %v362 = vrot.slane %v355, %v361
        %v364 = vlaneseq
        %vm365 = vcmp.ge.s32.totalorder %v364, 0
        %vm366 = vcmp.lt.s32.totalorder %v364, 512
        %vm367 = vmand %vm365, %vm366
        %368 = vst.msk [vmem:[%s134] sm:$0xf] %vm367, %v362
        %s369 = sand.u32 %s52, 1
        %s370 = scalar_lea.sflag [#allocation4], %s369
        %s371 = sand.u32 %s52, 1
        %s372 = smul.addr %s371, 4
        %s373 = scalar_lea.vmem [#allocation5], %s372
        // Predicated region
        $region29: #{tpu_custom_call.1} parent=23 // pred_check
          %p374 = pneg %p62
        $region30: #{tpu_custom_call.1} parent=23 // pred_check_branch
          %376 = sbr.rel (%p374) target = $region32
        $region31: #{tpu_custom_call.1} parent=23 // pred_region
          %s377 = smul.u32 4, %s18
          %s379 = ssub.s32 64, 64
          %380 = vsyncadd %s370, %s379
          %s381 = smul.addr %s377, 16
          %s382 = scalar_lea.hbm %s1, %s381
          %s384 = sshll.u32 %s373, 4
          %s385 = int_to_ptr.vmem [resolvable:$true] %s384
          %387 = dma.vmem_to_hbm [thread:$0]  %s385, 64, %s382, %s370
        $region32: #{tpu_custom_call.1} parent=23 // pred_fallthru
          _
      $region24: #{tpu_custom_call.1} parent=5 // pred_fallthru
        _
      %p388 = scmp.le.s32.totalorder 2, %s13
      // Predicated region
      $region33: #{tpu_custom_call.1} parent=5 // pred_check
        %p389 = pneg %p388
      $region34: #{tpu_custom_call.1} parent=5 // pred_check_branch
        %391 = sbr.rel (%p389) target = $region36
      $region35: #{tpu_custom_call.1} parent=5 // pred_region
        %s392 = ssub.s32 %s13, 2
        // Predicated region
        $region37: #{tpu_custom_call.1} parent=35 // pred_check
          %p393 = pneg %p68
        $region38: #{tpu_custom_call.1} parent=35 // pred_check_branch
          %395 = sbr.rel (%p393) target = $region40
        $region39: #{tpu_custom_call.1} parent=35 // pred_region
          %s396 = sand.u32 %s53, 1
          %s397 = scalar_lea.sflag [#allocation4], %s396
          %s398 = sand.u32 %s53, 1
          %s399 = smul.addr %s398, 4
          %s400 = scalar_lea.vmem [#allocation5], %s399
          %401 = dma.done %s397, 64
        $region40: #{tpu_custom_call.1} parent=35 // pred_fallthru
          _
      $region36: #{tpu_custom_call.1} parent=5 // pred_fallthru
        _
    $region6: #{tpu_custom_call.1} parent=1 // loop_footer
      %s17 = sadd.s32 1, %s13
    $region7: #{tpu_custom_call.1} parent=1 // loop_footer_branch
      %12 = sbr.rel target = $region3
    $region8: #{tpu_custom_call.1} parent=1 // loop_exit
      _
    %402 = vsyncpa [#allocation3], 1
    %s403 = scalar_lea.sflag [#allocation3], 1
    %404 = vsyncpa %s403, 1
    %405 = vsyncpa [#allocation4], 1
    %s406 = scalar_lea.sflag [#allocation4], 1
    %407 = vsyncpa %s406, 1

</llo_original>
